<compile_context>
chip_gen: v6e
topology: v6e:2x2x1
jax: 0.10.0
libtpu: 0.0.40
codegen_flags: <defaults>
</compile_context>

<pallas_src>
import jax
import jax.numpy as jnp
from jax.experimental import pallas as pl
from jax.experimental.pallas import tpu as pltpu

HIDDEN = 20
PACK = 48  # >= 2*HIDDEN + 1, multiple of 8 (sublane aligned)


# --------------------------------------------------------------------------- #
# Kernel: fused two-head critic MLP, everything resident in VMEM.
# --------------------------------------------------------------------------- #
def _critic_kernel(x_ref, sg_ref, u_ref,
                   wax_ref, wag_ref, wau_ref, ba_ref,
                   wb_ref, wc1_ref, wc2_ref,
                   q1_ref, q2_ref):
    """Layer 1: h = relu(x@Wa_x + sg@Wa_sg + u@Wa_u + ba)   (ba[2H]=1 -> ones col)
       Layer 2: h = relu(h @ Wb)            (bias + passthrough folded into Wb)
       Layer 3: q1 = h @ wc1 ; q2 = h @ wc2 (biases folded at row 2H)."""
    f32 = jnp.float32
    bf16 = jnp.bfloat16

    x = x_ref[...].astype(bf16)
    sg = sg_ref[...].astype(bf16)
    u = u_ref[...].astype(bf16)

    h = jnp.dot(x, wax_ref[...], preferred_element_type=f32)
    h = h + jnp.dot(sg, wag_ref[...], preferred_element_type=f32)
    h = h + jnp.dot(u, wau_ref[...], preferred_element_type=f32)
    h = h + ba_ref[...]                       # bias row + ones passthrough
    h = jnp.maximum(h, 0.0).astype(bf16)      # ReLU in f32, then bf16 (v5e-safe)

    h = jnp.dot(h, wb_ref[...], preferred_element_type=f32)
    h = jnp.maximum(h, 0.0).astype(bf16)

    q1_ref[...] = jnp.dot(h, wc1_ref[...], preferred_element_type=f32)
    q2_ref[...] = jnp.dot(h, wc2_ref[...], preferred_element_type=f32)


# --------------------------------------------------------------------------- #
# Parameter packing (one-off, outside the kernel).
# --------------------------------------------------------------------------- #
def pack_params(params, state_dim, goal_dim, action_dim):
    """Pack the 12 Linear params (weights stored as (in, out)) for the kernel."""
    (w1, b1, w2, b2, w3, b3, w4, b4, w5, b5, w6, b6) = params
    H = HIDDEN
    d_in = state_dim + goal_dim + action_dim
    assert 2 * H + 1 <= PACK

    def bfq(a):  # bf16-quantized f32 (matches the bf16 reference numerics)
        return a.astype(jnp.bfloat16).astype(jnp.float32)

    # Layer-1 weights: both heads side by side along the output dim, then split
    # into per-input row blocks so the kernel never needs the concatenated xu.
    wa = jnp.zeros((d_in, PACK), jnp.float32)
    wa = wa.at[:, 0:H].set(w1)
    wa = wa.at[:, H:2 * H].set(w4)
    wa = wa.astype(jnp.bfloat16)
    wa_x = wa[0:state_dim]
    wa_g = wa[state_dim:state_dim + goal_dim]
    wa_u = wa[state_dim + goal_dim:]

    # Layer-1 bias row (bf16-quantized values, f32 add) + ones passthrough.
    ba = jnp.zeros((1, PACK), jnp.float32)
    ba = ba.at[0, 0:H].set(bfq(b1.reshape(-1)))
    ba = ba.at[0, H:2 * H].set(bfq(b4.reshape(-1)))
    ba = ba.at[0, 2 * H].set(1.0)

    # Layer 2: block-diag(l2, l5), bias row at row 2H, passthrough kept alive.
    wb = jnp.zeros((PACK, PACK), jnp.float32)
    wb = wb.at[0:H, 0:H].set(w2)
    wb = wb.at[H:2 * H, H:2 * H].set(w5)
    wb = wb.at[2 * H, 0:H].set(b2.reshape(-1))
    wb = wb.at[2 * H, H:2 * H].set(b5.reshape(-1))
    wb = wb.at[2 * H, 2 * H].set(1.0)

    # Layer 3: one (PACK, 1) column per head, bias folded at row 2H.
    wc1 = jnp.zeros((PACK, 1), jnp.float32)
    wc1 = wc1.at[0:H, 0].set(w3.reshape(-1))
    wc1 = wc1.at[2 * H, 0].set(b3.reshape(-1)[0])
    wc2 = jnp.zeros((PACK, 1), jnp.float32)
    wc2 = wc2.at[H:2 * H, 0].set(w6.reshape(-1))
    wc2 = wc2.at[2 * H, 0].set(b6.reshape(-1)[0])

    return dict(
        wa_x=wa_x, wa_g=wa_g, wa_u=wa_u, ba=ba,
        wb=wb.astype(jnp.bfloat16),
        wc1=wc1.astype(jnp.bfloat16), wc2=wc2.astype(jnp.bfloat16),
    )


# --------------------------------------------------------------------------- #
# Forward wrapper: exactly one pallas_call, no pre/post HLO glue.
# --------------------------------------------------------------------------- #
def controller_critic_forward(x, sg, u, packed, *, batch_tile=512):
    """Returns (q1, q2), each (batch, 1) float32."""
    B, dx = x.shape
    dg, du = sg.shape[1], u.shape[1]
    d_in = dx + dg + du

    wa_x, wa_g, wa_u = packed["wa_x"], packed["wa_g"], packed["wa_u"]
    ba, wb, wc1, wc2 = packed["ba"], packed["wb"], packed["wc1"], packed["wc2"]
    operands = (x, sg, u, wa_x, wa_g, wa_u, ba, wb, wc1, wc2)

    weight_bytes = 2 * (wa_x.size + wa_g.size + wa_u.size
                        + wb.size + wc1.size + wc2.size) + 4 * ba.size
    cost = pl.CostEstimate(
        flops=2 * B * (d_in * PACK + PACK * PACK + 2 * PACK),
        transcendentals=0,
        bytes_accessed=B * d_in * 4 + B * 2 * 4 + weight_bytes,
    )
    out_shape = (jax.ShapeDtypeStruct((B, 1), jnp.float32),
                 jax.ShapeDtypeStruct((B, 1), jnp.float32))

    if B <= 128:
        # Grid-free: whole problem is one VMEM tile; no pipeline overhead.
        vmem = pl.BlockSpec(memory_space=pltpu.MemorySpace.VMEM)
        return pl.pallas_call(
            _critic_kernel,
            out_shape=out_shape,
            in_specs=[vmem] * len(operands),
            out_specs=(vmem, vmem),
            cost_estimate=cost,
        )(*operands)

    # Batch-tiled path: weights stay VMEM-resident (constant index_map), the
    # batch grid is "parallel" so it shards across v7x's two TensorCores and
    # pipelines input/output DMAs under MXU work on all generations.
    tb = min(batch_tile, B)  # either divisible by 8 (512) or == B -> legal block
    grid = (pl.cdiv(B, tb),)

    def batch_spec(shape):
        return pl.BlockSpec((tb,) + tuple(shape[1:]), lambda i: (i, 0))

    def resident(a):
        return pl.BlockSpec(a.shape, lambda i: (0, 0))

    in_specs = [
        batch_spec(x.shape), batch_spec(sg.shape), batch_spec(u.shape),
        resident(wa_x), resident(wa_g), resident(wa_u), resident(ba),
        resident(wb), resident(wc1), resident(wc2),
    ]
    out_specs = (pl.BlockSpec((tb, 1), lambda i: (i, 0)),
                 pl.BlockSpec((tb, 1), lambda i: (i, 0)))
    # TODO(synk): for very large B, a lane-dense (2, B) output layout would
    # avoid masked (B, 1) partial stores; negligible at these sizes.
    return pl.pallas_call(
        _critic_kernel,
        out_shape=out_shape,
        grid=grid,
        in_specs=in_specs,
        out_specs=out_specs,
        compiler_params=pltpu.CompilerParams(
            dimension_semantics=("parallel",)),
        cost_estimate=cost,
    )(*operands)


# --------------------------------------------------------------------------- #
# Parameter init (deterministic synthetic) and references.
# --------------------------------------------------------------------------- #
def init_params(key, state_dim, goal_dim, action_dim):
    """Weights stored as (in, out): xu @ W + b == PyTorch x @ W.T + b."""
    d_in = state_dim + goal_dim + action_dim
    shapes = [
        (d_in, HIDDEN), (HIDDEN,),      # l1
        (HIDDEN, HIDDEN), (HIDDEN,),    # l2
        (HIDDEN, 1), (1,),              # l3
        (d_in, HIDDEN), (HIDDEN,),      # l4
        (HIDDEN, HIDDEN), (HIDDEN,),    # l5
        (HIDDEN, 1), (1,),              # l6
    ]
    keys = jax.random.split(key, len(shapes))
    params = []
    for k, s in zip(keys, shapes):
        bound = 1.0 / jnp.sqrt(jnp.float32(s[0]))
        p = jax.random.uniform(k, s, jnp.float32, -bound, bound)
        if len(s) == 1:
            p = p.reshape(1, -1)
        params.append(p)
    return tuple(params)


def reference_forward(x, sg, u, params):
    """Original module semantics, full f32."""
    (w1, b1, w2, b2, w3, b3, w4, b4, w5, b5, w6, b6) = params
    xu = jnp.concatenate([x, sg, u], axis=1)
    h1 = jax.nn.relu(xu @ w1 + b1)
    h1 = jax.nn.relu(h1 @ w2 + b2)
    q1 = h1 @ w3 + b3
    h2 = jax.nn.relu(xu @ w4 + b4)
    h2 = jax.nn.relu(h2 @ w5 + b5)
    q2 = h2 @ w6 + b6
    return q1, q2


def reference_forward_bf16(x, sg, u, params):
    """Emulates the kernel's numerics: bf16 operands, f32 accumulation."""
    def bf(a):
        return a.astype(jnp.bfloat16).astype(jnp.float32)

    hp = jax.lax.Precision.HIGHEST
    (w1, b1, w2, b2, w3, b3, w4, b4, w5, b5, w6, b6) = params
    xu = bf(jnp.concatenate([x, sg, u], axis=1))

    def lin(a, w, b):
        return jnp.dot(a, bf(w), precision=hp) + bf(b)

    h1 = bf(jax.nn.relu(lin(xu, w1, b1)))
    h1 = bf(jax.nn.relu(lin(h1, w2, b2)))
    q1 = lin(h1, w3, b3)
    h2 = bf(jax.nn.relu(lin(xu, w4, b4)))
    h2 = bf(jax.nn.relu(lin(h2, w5, b5)))
    q2 = lin(h2, w6, b6)
    return q1, q2


if __name__ == "__main__":
    state_dim, goal_dim, action_dim = 10, 3, 3
    batch = 8

    key = jax.random.PRNGKey(0)
    kx, kg, ku, kp, kbx, kbg, kbu = jax.random.split(key, 7)
    x = jax.random.normal(kx, (batch, state_dim), jnp.float32)
    sg = jax.random.normal(kg, (batch, goal_dim), jnp.float32)
    u = jax.random.normal(ku, (batch, action_dim), jnp.float32)
    params = init_params(kp, state_dim, goal_dim, action_dim)
    packed = pack_params(params, state_dim, goal_dim, action_dim)

    # Small batch: grid-free path.
    q1, q2 = controller_critic_forward(x, sg, u, packed)
    jax.block_until_ready((q1, q2))
    e1, e2 = reference_forward_bf16(x, sg, u, params)
    r1, r2 = reference_forward(x, sg, u, params)
    assert q1.shape == (batch, 1) and q2.shape == (batch, 1)
    assert jnp.allclose(q1, e1, atol=5e-3, rtol=5e-3)
    assert jnp.allclose(q2, e2, atol=5e-3, rtol=5e-3)
    assert jnp.allclose(q1, r1, atol=1e-1, rtol=1e-1)
    assert jnp.allclose(q2, r2, atol=1e-1, rtol=1e-1)

    # Large batch: batch-tiled, megacore-parallel path.
    B_big = 1024
    xb = jax.random.normal(kbx, (B_big, state_dim), jnp.float32)
    sgb = jax.random.normal(kbg, (B_big, goal_dim), jnp.float32)
    ub = jax.random.normal(kbu, (B_big, action_dim), jnp.float32)
    q1b, q2b = controller_critic_forward(xb, sgb, ub, packed, batch_tile=256)
    jax.block_until_ready((q1b, q2b))
    e1b, e2b = reference_forward_bf16(xb, sgb, ub, params)
    r1b, r2b = reference_forward(xb, sgb, ub, params)
    assert q1b.shape == (B_big, 1) and q2b.shape == (B_big, 1)
    assert jnp.allclose(q1b, e1b, atol=5e-3, rtol=5e-3)
    assert jnp.allclose(q2b, e2b, atol=5e-3, rtol=5e-3)
    assert jnp.allclose(q1b, r1b, atol=1e-1, rtol=1e-1)
    assert jnp.allclose(q2b, r2b, atol=1e-1, rtol=1e-1)

    print("KERNEL_OK")
</pallas_src>

<mosaic_0001>
module attributes {stable_mosaic.version = 11 : i64} {
  func.func @_critic_kernel(%arg0: memref<8x10xf32, #tpu.memory_space<vmem>>, %arg1: memref<8x3xf32, #tpu.memory_space<vmem>>, %arg2: memref<8x3xf32, #tpu.memory_space<vmem>>, %arg3: memref<10x48xbf16, #tpu.memory_space<vmem>>, %arg4: memref<3x48xbf16, #tpu.memory_space<vmem>>, %arg5: memref<3x48xbf16, #tpu.memory_space<vmem>>, %arg6: memref<1x48xf32, #tpu.memory_space<vmem>>, %arg7: memref<48x48xbf16, #tpu.memory_space<vmem>>, %arg8: memref<48x1xbf16, #tpu.memory_space<vmem>>, %arg9: memref<48x1xbf16, #tpu.memory_space<vmem>>, %arg10: memref<8x1xf32, #tpu.memory_space<vmem>>, %arg11: memref<8x1xf32, #tpu.memory_space<vmem>>) attributes {dimension_semantics = [], scalar_prefetch = 0 : i64, scratch_operands = 0 : i64, tpu.core_type = #tpu.core_type<tc>} {
    %c0 = arith.constant 0 : index
    %c0_0 = arith.constant 0 : index
    %0 = vector.load %arg0[%c0, %c0_0] : memref<8x10xf32, #tpu.memory_space<vmem>>, vector<8x10xf32>
    %1 = arith.truncf %0 : vector<8x10xf32> to vector<8x10xbf16>
    %c0_1 = arith.constant 0 : index
    %c0_2 = arith.constant 0 : index
    %2 = vector.load %arg1[%c0_1, %c0_2] : memref<8x3xf32, #tpu.memory_space<vmem>>, vector<8x3xf32>
    %3 = arith.truncf %2 : vector<8x3xf32> to vector<8x3xbf16>
    %c0_3 = arith.constant 0 : index
    %c0_4 = arith.constant 0 : index
    %4 = vector.load %arg2[%c0_3, %c0_4] : memref<8x3xf32, #tpu.memory_space<vmem>>, vector<8x3xf32>
    %5 = arith.truncf %4 : vector<8x3xf32> to vector<8x3xbf16>
    %c0_5 = arith.constant 0 : index
    %c0_6 = arith.constant 0 : index
    %6 = vector.load %arg3[%c0_5, %c0_6] : memref<10x48xbf16, #tpu.memory_space<vmem>>, vector<10x48xbf16>
    %cst = arith.constant dense<0.000000e+00> : vector<8x48xf32>
    %7 = tpu.matmul %1, %6, %cst {dimension_numbers = #tpu.dot_dimension_numbers<[1], [0], [0], [1], [0, 0, 1, 1], [], []>} : vector<8x10xbf16>, vector<10x48xbf16>, vector<8x48xf32> -> vector<8x48xf32>
    %c0_7 = arith.constant 0 : index
    %c0_8 = arith.constant 0 : index
    %8 = vector.load %arg4[%c0_7, %c0_8] : memref<3x48xbf16, #tpu.memory_space<vmem>>, vector<3x48xbf16>
    %cst_9 = arith.constant dense<0.000000e+00> : vector<8x48xf32>
    %9 = tpu.matmul %3, %8, %cst_9 {dimension_numbers = #tpu.dot_dimension_numbers<[1], [0], [0], [1], [0, 0, 1, 1], [], []>} : vector<8x3xbf16>, vector<3x48xbf16>, vector<8x48xf32> -> vector<8x48xf32>
    %10 = arith.addf %7, %9 : vector<8x48xf32>
    %c0_10 = arith.constant 0 : index
    %c0_11 = arith.constant 0 : index
    %11 = vector.load %arg5[%c0_10, %c0_11] : memref<3x48xbf16, #tpu.memory_space<vmem>>, vector<3x48xbf16>
    %cst_12 = arith.constant dense<0.000000e+00> : vector<8x48xf32>
    %12 = tpu.matmul %5, %11, %cst_12 {dimension_numbers = #tpu.dot_dimension_numbers<[1], [0], [0], [1], [0, 0, 1, 1], [], []>} : vector<8x3xbf16>, vector<3x48xbf16>, vector<8x48xf32> -> vector<8x48xf32>
    %13 = arith.addf %10, %12 : vector<8x48xf32>
    %c0_13 = arith.constant 0 : index
    %c0_14 = arith.constant 0 : index
    %14 = vector.load %arg6[%c0_13, %c0_14] : memref<1x48xf32, #tpu.memory_space<vmem>>, vector<1x48xf32>
    %15 = vector.broadcast %14 : vector<1x48xf32> to vector<8x48xf32>
    %16 = arith.addf %13, %15 : vector<8x48xf32>
    %cst_15 = arith.constant 0.000000e+00 : f32
    %17 = vector.broadcast %cst_15 : f32 to vector<8x48xf32>
    %18 = arith.maximumf %16, %17 : vector<8x48xf32>
    %19 = arith.truncf %18 : vector<8x48xf32> to vector<8x48xbf16>
    %c0_16 = arith.constant 0 : index
    %c0_17 = arith.constant 0 : index
    %20 = vector.load %arg7[%c0_16, %c0_17] : memref<48x48xbf16, #tpu.memory_space<vmem>>, vector<48x48xbf16>
    %cst_18 = arith.constant dense<0.000000e+00> : vector<8x48xf32>
    %21 = tpu.matmul %19, %20, %cst_18 {dimension_numbers = #tpu.dot_dimension_numbers<[1], [0], [0], [1], [0, 0, 1, 1], [], []>} : vector<8x48xbf16>, vector<48x48xbf16>, vector<8x48xf32> -> vector<8x48xf32>
    %cst_19 = arith.constant 0.000000e+00 : f32
    %22 = vector.broadcast %cst_19 : f32 to vector<8x48xf32>
    %23 = arith.maximumf %21, %22 : vector<8x48xf32>
    %24 = arith.truncf %23 : vector<8x48xf32> to vector<8x48xbf16>
    %c0_20 = arith.constant 0 : index
    %c0_21 = arith.constant 0 : index
    %25 = vector.load %arg8[%c0_20, %c0_21] : memref<48x1xbf16, #tpu.memory_space<vmem>>, vector<48x1xbf16>
    %cst_22 = arith.constant dense<0.000000e+00> : vector<8x1xf32>
    %26 = tpu.matmul %24, %25, %cst_22 {dimension_numbers = #tpu.dot_dimension_numbers<[1], [0], [0], [1], [0, 0, 1, 1], [], []>} : vector<8x48xbf16>, vector<48x1xbf16>, vector<8x1xf32> -> vector<8x1xf32>
    %c0_23 = arith.constant 0 : index
    %c0_24 = arith.constant 0 : index
    %27 = vector.load %arg10[%c0_23, %c0_24] : memref<8x1xf32, #tpu.memory_space<vmem>>, vector<8x1xf32>
    tpu.vector_store %arg10[%c0_23, %c0_24], %26 {strides = array<i32>} : memref<8x1xf32, #tpu.memory_space<vmem>>, vector<8x1xf32>,
    %c0_25 = arith.constant 0 : index
    %c0_26 = arith.constant 0 : index
    %28 = vector.load %arg9[%c0_25, %c0_26] : memref<48x1xbf16, #tpu.memory_space<vmem>>, vector<48x1xbf16>
    %cst_27 = arith.constant dense<0.000000e+00> : vector<8x1xf32>
    %29 = tpu.matmul %24, %28, %cst_27 {dimension_numbers = #tpu.dot_dimension_numbers<[1], [0], [0], [1], [0, 0, 1, 1], [], []>} : vector<8x48xbf16>, vector<48x1xbf16>, vector<8x1xf32> -> vector<8x1xf32>
    %c0_28 = arith.constant 0 : index
    %c0_29 = arith.constant 0 : index
    %30 = vector.load %arg11[%c0_28, %c0_29] : memref<8x1xf32, #tpu.memory_space<vmem>>, vector<8x1xf32>
    tpu.vector_store %arg11[%c0_28, %c0_29], %29 {strides = array<i32>} : memref<8x1xf32, #tpu.memory_space<vmem>>, vector<8x1xf32>,
    return
  }
}

</mosaic_0001>

<llo_original>
// kernel: tpu_custom_call.1
$region0: #{tpu_custom_call.1}
  #allocation0 [shape = 'u32[]', space=smem, size = 0x4, offset = 0x4, fixed_abs, tag = 'smem constant byte address 0x4 - core index']
  #allocation1 [shape = 'u32[144,128]{1,0:T(1,128)}', space=vmem, size = 0x12000, scoped, tag = 'internal scratch']
  %s0 = inlined_call_operand.vmem [shape: f32[8,10], index: 0, kind: input, shape index: {}]
  %s1 = inlined_call_operand.vmem [shape: f32[8,3], index: 1, kind: input, shape index: {}]
  %s2 = inlined_call_operand.vmem [shape: f32[8,3], index: 2, kind: input, shape index: {}]
  %s3 = inlined_call_operand.vmem [shape: bf16[10,48], index: 3, kind: input, shape index: {}]
  %s4 = inlined_call_operand.vmem [shape: bf16[3,48], index: 4, kind: input, shape index: {}]
  %s5 = inlined_call_operand.vmem [shape: bf16[3,48], index: 5, kind: input, shape index: {}]
  %s6 = inlined_call_operand.vmem [shape: f32[1,48], index: 6, kind: input, shape index: {}]
  %s7 = inlined_call_operand.vmem [shape: bf16[48,48], index: 7, kind: input, shape index: {}]
  %s8 = inlined_call_operand.vmem [shape: bf16[48,1], index: 8, kind: input, shape index: {}]
  %s9 = inlined_call_operand.vmem [shape: bf16[48,1], index: 9, kind: input, shape index: {}]
  %s10 = inlined_call_operand.vmem [shape: f32[8,1], index: 10, kind: output, shape index: {0}]
  %s11 = inlined_call_operand.vmem [shape: f32[8,1], index: 11, kind: output, shape index: {1}]
  %12 = xla_tuple %s10, %s11
  %s13 = sld [smem:[#allocation0]]
  $region58: #{tpu_custom_call.1} parent=0
    _
  %s15 = ssub.s32 1, %s13
  %s16 = scalar_select 0, %s15, %s13
  // Predicated region
  $region2: #{tpu_custom_call.1} parent=0 // pred_check
    _
  $region3: #{tpu_custom_call.1} parent=0 // pred_check_branch
    %18 = sbr.rel (0) target = $region5
  $region4: #{tpu_custom_call.1} parent=0 // pred_region
    _
  $region5: #{tpu_custom_call.1} parent=0 // pred_fallthru
    _
  // Predicated region
  $region6: #{tpu_custom_call.1} parent=0 // pred_check
    _
  $region7: #{tpu_custom_call.1} parent=0 // pred_check_branch
    %20 = sbr.rel (0) target = $region9
  $region8: #{tpu_custom_call.1} parent=0 // pred_region
    _
  $region9: #{tpu_custom_call.1} parent=0 // pred_fallthru
    _
  // Predicated region
  $region10: #{tpu_custom_call.1} parent=0 // pred_check
    _
  $region11: #{tpu_custom_call.1} parent=0 // pred_check_branch
    %22 = sbr.rel (0) target = $region13
  $region12: #{tpu_custom_call.1} parent=0 // pred_region
    _
  $region13: #{tpu_custom_call.1} parent=0 // pred_fallthru
    _
  // Predicated region
  $region14: #{tpu_custom_call.1} parent=0 // pred_check
    _
  $region15: #{tpu_custom_call.1} parent=0 // pred_check_branch
    %24 = sbr.rel (0) target = $region17
  $region16: #{tpu_custom_call.1} parent=0 // pred_region
    _
  $region17: #{tpu_custom_call.1} parent=0 // pred_fallthru
    _
  // Predicated region
  $region18: #{tpu_custom_call.1} parent=0 // pred_check
    _
  $region19: #{tpu_custom_call.1} parent=0 // pred_check_branch
    %26 = sbr.rel (0) target = $region21
  $region20: #{tpu_custom_call.1} parent=0 // pred_region
    _
  $region21: #{tpu_custom_call.1} parent=0 // pred_fallthru
    _
  // Predicated region
  $region22: #{tpu_custom_call.1} parent=0 // pred_check
    _
  $region23: #{tpu_custom_call.1} parent=0 // pred_check_branch
    %28 = sbr.rel (0) target = $region25
  $region24: #{tpu_custom_call.1} parent=0 // pred_region
    _
  $region25: #{tpu_custom_call.1} parent=0 // pred_fallthru
    _
  // Predicated region
  $region26: #{tpu_custom_call.1} parent=0 // pred_check
    _
  $region27: #{tpu_custom_call.1} parent=0 // pred_check_branch
    %30 = sbr.rel (0) target = $region29
  $region28: #{tpu_custom_call.1} parent=0 // pred_region
    _
  $region29: #{tpu_custom_call.1} parent=0 // pred_fallthru
    _
  // Predicated region
  $region30: #{tpu_custom_call.1} parent=0 // pred_check
    _
  $region31: #{tpu_custom_call.1} parent=0 // pred_check_branch
    %32 = sbr.rel (0) target = $region33
  $region32: #{tpu_custom_call.1} parent=0 // pred_region
    _
  $region33: #{tpu_custom_call.1} parent=0 // pred_fallthru
    _
  // Predicated region
  $region34: #{tpu_custom_call.1} parent=0 // pred_check
    _
  $region35: #{tpu_custom_call.1} parent=0 // pred_check_branch
    %34 = sbr.rel (0) target = $region37
  $region36: #{tpu_custom_call.1} parent=0 // pred_region
    _
  $region37: #{tpu_custom_call.1} parent=0 // pred_fallthru
    _
  // Predicated region
  $region38: #{tpu_custom_call.1} parent=0 // pred_check
    _
  $region39: #{tpu_custom_call.1} parent=0 // pred_check_branch
    %36 = sbr.rel (0) target = $region41
  $region40: #{tpu_custom_call.1} parent=0 // pred_region
    _
  $region41: #{tpu_custom_call.1} parent=0 // pred_fallthru
    _
  %v38 = vld [vmem:[%s0] sm:$0xff]
  %v39 = vpack.c.bf16 %v38, %v38
  %v40 = vld [vmem:[%s1] sm:$0xff]
  %v41 = vpack.c.bf16 %v40, %v40
  %v42 = vld [vmem:[%s2] sm:$0xff]
  %v43 = vpack.c.bf16 %v42, %v42
  %v44 = vld [vmem:[%s3] sm:$0xf]
  %v45 = vld [vmem:[%s3 + $0x4] sm:$0x1]
  %v46 = vld [vmem:[%s4] sm:$0x3]
  %vm47 = vcmask 23552
  %v49 = vsel %vm47, %v41, 0
  %vm51 = vcmask 1040384
  %vm52 = vcmask 1041408
  %v53 = vsel %vm51, 4294967295, 65535
  %v54 = vsel %vm52, %v53, 0
  %v56 = vand.u32 %v46, %v54
  %58 = vmatprep.subr.bf16.mxu0 0
  %59 = vmatpush1.bf16.msra.mxu0 0
  %60 = vmatprep.subr.bf16.mxu0 0
  %61 = vmatpush1.bf16.msra.mxu0 0
  %62 = vmatprep.subr.bf16.mxu0 0
  %63 = vmatpush1.bf16.msra.mxu0 0
  %64 = vmatprep.subr.bf16.mxu0 0
  %65 = vmatpush1.bf16.msra.mxu0 0
  %66 = vmatprep.subr.bf16.mxu0 0
  %67 = vmatpush1.bf16.msra.mxu0 0
  %68 = vmatprep.subr.bf16.mxu0 0
  %69 = vmatpush1.bf16.msra.mxu0 0
  %70 = vmatprep.subr.bf16.mxu0 0
  %71 = vmatpush1.bf16.msra.mxu0 0
  %72 = vmatprep.subr.bf16.mxu0 0
  %73 = vmatpush1.bf16.msra.mxu0 %v56
  %74 = vmatprep.subr.bf16.mxu0 0
  %75 = vmatpush2.bf16.msra.mxu0 0
  %76 = vmatprep.subr.bf16.mxu0 0
  %77 = vmatpush2.bf16.msra.mxu0 0
  %78 = vmatprep.subr.bf16.mxu0 0
  %79 = vmatpush2.bf16.msra.mxu0 0
  %80 = vmatprep.subr.bf16.mxu0 0
  %81 = vmatpush2.bf16.msra.mxu0 0
  %82 = vmatprep.subr.bf16.mxu0 0
  %83 = vmatpush2.bf16.msra.mxu0 0
  %84 = vmatprep.subr.bf16.mxu0 0
  %85 = vmatpush2.bf16.msra.mxu0 0
  %86 = vmatprep.subr.bf16.mxu0 0
  %87 = vmatpush2.bf16.msra.mxu0 0
  %88 = vmatprep.subr.bf16.mxu0 0
  %89 = vmatpush2.bf16.msra.mxu0 0
  %90 = vmatprep.mubr.bf16.mxu0 0
  %91 = vmatmul.mubr.bf16.gmra.mxu0 %v49
  %v92 = vpop.f32.mrf.mxu0
  %v93 = vadd.f32 0.0, %v92
  %v94 = vpop.f32.mrf.mxu0
  %v95 = vpop.f32.mrf.mxu0
  %v96 = vpop.f32.mrf.mxu0
  %97 = vdwg.mxu0
  %v100 = vunpack.c.l.b16 %v44
  %v101 = vunpack.c.l.b16 %v45
  %v102 = vpack.c.b16 %v101, %v100
  %vm103 = vcmask 80896
  %v105 = vsel %vm103, %v39, 0
  %vm107 = vcmask 1044480
  %v109 = vsel %vm107, %v102, 0
  %111 = vmatprep.subr.bf16.mxu0 0
  %112 = vmatpush1.bf16.msra.mxu0 0
  %113 = vmatprep.subr.bf16.mxu0 0
  %114 = vmatpush1.bf16.msra.mxu0 0
  %115 = vmatprep.subr.bf16.mxu0 0
  %116 = vmatpush1.bf16.msra.mxu0 0
  %117 = vmatprep.subr.bf16.mxu0 0
  %118 = vmatpush1.bf16.msra.mxu0 0
  %119 = vmatprep.subr.bf16.mxu0 0
  %120 = vmatpush1.bf16.msra.mxu0 0
  %121 = vmatprep.subr.bf16.mxu0 0
  %122 = vmatpush1.bf16.msra.mxu0 0
  %123 = vmatprep.subr.bf16.mxu0 0
  %124 = vmatpush1.bf16.msra.mxu0 0
  %125 = vmatprep.subr.bf16.mxu0 0
  %126 = vmatpush1.bf16.msra.mxu0 %v109
  %127 = vmatprep.subr.bf16.mxu0 0
  %128 = vmatpush2.bf16.msra.mxu0 0
  %129 = vmatprep.subr.bf16.mxu0 0
  %130 = vmatpush2.bf16.msra.mxu0 0
  %131 = vmatprep.subr.bf16.mxu0 0
  %132 = vmatpush2.bf16.msra.mxu0 0
  %133 = vmatprep.subr.bf16.mxu0 0
  %134 = vmatpush2.bf16.msra.mxu0 0
  %135 = vmatprep.subr.bf16.mxu0 0
  %136 = vmatpush2.bf16.msra.mxu0 0
  %137 = vmatprep.subr.bf16.mxu0 0
  %138 = vmatpush2.bf16.msra.mxu0 0
  %139 = vmatprep.subr.bf16.mxu0 0
  %140 = vmatpush2.bf16.msra.mxu0 0
  %141 = vmatprep.subr.bf16.mxu0 0
  %142 = vmatpush2.bf16.msra.mxu0 0
  %143 = vmatprep.mubr.bf16.mxu0 0
  %144 = vmatmul.mubr.bf16.gmra.mxu0 %v105
  %v145 = vpop.f32.mrf.mxu0
  %v146 = vadd.f32 %v93, %v145
  %v147 = vpop.f32.mrf.mxu0
  %v148 = vpop.f32.mrf.mxu0
  %v149 = vpop.f32.mrf.mxu0
  %150 = vdwg.mxu0
  %v151 = vld [vmem:[%s5] sm:$0x3]
  %v153 = vsel %vm47, %v43, 0
  %v156 = vand.u32 %v151, %v54
  %158 = vmatprep.subr.bf16.mxu0 0
  %159 = vmatpush1.bf16.msra.mxu0 0
  %160 = vmatprep.subr.bf16.mxu0 0
  %161 = vmatpush1.bf16.msra.mxu0 0
  %162 = vmatprep.subr.bf16.mxu0 0
  %163 = vmatpush1.bf16.msra.mxu0 0
  %164 = vmatprep.subr.bf16.mxu0 0
  %165 = vmatpush1.bf16.msra.mxu0 0
  %166 = vmatprep.subr.bf16.mxu0 0
  %167 = vmatpush1.bf16.msra.mxu0 0
  %168 = vmatprep.subr.bf16.mxu0 0
  %169 = vmatpush1.bf16.msra.mxu0 0
  %170 = vmatprep.subr.bf16.mxu0 0
  %171 = vmatpush1.bf16.msra.mxu0 0
  %172 = vmatprep.subr.bf16.mxu0 0
  %173 = vmatpush1.bf16.msra.mxu0 %v156
  %174 = vmatprep.subr.bf16.mxu0 0
  %175 = vmatpush2.bf16.msra.mxu0 0
  %176 = vmatprep.subr.bf16.mxu0 0
  %177 = vmatpush2.bf16.msra.mxu0 0
  %178 = vmatprep.subr.bf16.mxu0 0
  %179 = vmatpush2.bf16.msra.mxu0 0
  %180 = vmatprep.subr.bf16.mxu0 0
  %181 = vmatpush2.bf16.msra.mxu0 0
  %182 = vmatprep.subr.bf16.mxu0 0
  %183 = vmatpush2.bf16.msra.mxu0 0
  %184 = vmatprep.subr.bf16.mxu0 0
  %185 = vmatpush2.bf16.msra.mxu0 0
  %186 = vmatprep.subr.bf16.mxu0 0
  %187 = vmatpush2.bf16.msra.mxu0 0
  %188 = vmatprep.subr.bf16.mxu0 0
  %189 = vmatpush2.bf16.msra.mxu0 0
  %190 = vmatprep.mubr.bf16.mxu0 0
  %191 = vmatmul.mubr.bf16.gmra.mxu0 %v153
  %v192 = vpop.f32.mrf.mxu0
  %v193 = vadd.f32 0.0, %v192
  %v194 = vpop.f32.mrf.mxu0
  %v195 = vpop.f32.mrf.mxu0
  %v196 = vpop.f32.mrf.mxu0
  %197 = vdwg.mxu0
  %v198 = vadd.f32 %v146, %v193
  %v199 = vld [vmem:[%s6] sm:$0x1]
  %v201 = vlaneseq
  %v202 = vshrl.u32 %v201, 7
  %v203 = vsub.s32 0, %v202
  %v204 = vrot.slane %v199, %v203
  %v206 = vadd.f32 %v198, %v204
  %v207 = vmax.f32 %v206, 0.0
  %v208 = vpack.c.bf16 %v207, %v207
  %v209 = vld [vmem:[%s7] sm:$0xf]
  %v210 = vld [vmem:[%s7 + $0x4] sm:$0xf]
  %v211 = vld [vmem:[%s7 + $0x8] sm:$0xf]
  %v212 = vld [vmem:[%s7 + $0xc] sm:$0xf]
  %v213 = vld [vmem:[%s7 + $0x10] sm:$0xf]
  %v214 = vld [vmem:[%s7 + $0x14] sm:$0xf]
  %v221 = vunpack.c.l.b16 %v209
  %v222 = vunpack.c.l.b16 %v210
  %v223 = vunpack.c.l.b16 %v211
  %v224 = vunpack.c.l.b16 %v212
  %v225 = vunpack.c.l.b16 %v213
  %v226 = vunpack.c.l.b16 %v214
  %v227 = vpack.c.b16 %v222, %v221
  %v228 = vpack.c.b16 %v224, %v223
  %v229 = vpack.c.b16 %v226, %v225
  %vm233 = vcmask 392192
  %v235 = vsel %vm233, %v208, 0
  %237 = vmatprep.subr.bf16.mxu0 0
  %238 = vmatpush1.bf16.msra.mxu0 0
  %239 = vmatprep.subr.bf16.mxu0 0
  %240 = vmatpush1.bf16.msra.mxu0 0
  %241 = vmatprep.subr.bf16.mxu0 0
  %242 = vmatpush1.bf16.msra.mxu0 0
  %243 = vmatprep.subr.bf16.mxu0 0
  %244 = vmatpush1.bf16.msra.mxu0 0
  %245 = vmatprep.subr.bf16.mxu0 0
  %246 = vmatpush1.bf16.msra.mxu0 0
  %247 = vmatprep.subr.bf16.mxu0 0
  %248 = vmatpush1.bf16.msra.mxu0 %v229
  %249 = vmatprep.subr.bf16.mxu0 0
  %250 = vmatpush1.bf16.msra.mxu0 %v228
  %251 = vmatprep.subr.bf16.mxu0 0
  %252 = vmatpush1.bf16.msra.mxu0 %v227
  %253 = vmatprep.subr.bf16.mxu0 0
  %254 = vmatpush2.bf16.msra.mxu0 0
  %255 = vmatprep.subr.bf16.mxu0 0
  %256 = vmatpush2.bf16.msra.mxu0 0
  %257 = vmatprep.subr.bf16.mxu0 0
  %258 = vmatpush2.bf16.msra.mxu0 0
  %259 = vmatprep.subr.bf16.mxu0 0
  %260 = vmatpush2.bf16.msra.mxu0 0
  %261 = vmatprep.subr.bf16.mxu0 0
  %262 = vmatpush2.bf16.msra.mxu0 0
  %263 = vmatprep.subr.bf16.mxu0 0
  %264 = vmatpush2.bf16.msra.mxu0 0
  %265 = vmatprep.subr.bf16.mxu0 0
  %266 = vmatpush2.bf16.msra.mxu0 0
  %267 = vmatprep.subr.bf16.mxu0 0
  %268 = vmatpush2.bf16.msra.mxu0 0
  %269 = vmatprep.mubr.bf16.mxu0 0
  %270 = vmatmul.mubr.bf16.gmra.mxu0 %v235
  %v271 = vpop.f32.mrf.mxu0
  %v272 = vadd.f32 0.0, %v271
  %v273 = vpop.f32.mrf.mxu0
  %v274 = vpop.f32.mrf.mxu0
  %v275 = vpop.f32.mrf.mxu0
  %276 = vdwg.mxu0
  %v277 = vmax.f32 %v272, 0.0
  %v278 = vpack.c.bf16 %v277, %v277
  %v279 = vld [vmem:[%s8] sm:$0xf]
  %v280 = vld [vmem:[%s8 + $0x4] sm:$0xf]
  %v281 = vld [vmem:[%s8 + $0x8] sm:$0xf]
  %v282 = vld [vmem:[%s8 + $0xc] sm:$0xf]
  %v283 = vld [vmem:[%s8 + $0x10] sm:$0xf]
  %v284 = vld [vmem:[%s8 + $0x14] sm:$0xf]
  %v291 = vunpack.c.l.b16 %v279
  %v292 = vunpack.c.l.b16 %v280
  %v293 = vunpack.c.l.b16 %v281
  %v294 = vunpack.c.l.b16 %v282
  %v295 = vunpack.c.l.b16 %v283
  %v296 = vunpack.c.l.b16 %v284
  %v297 = vpack.c.b16 %v292, %v291
  %v298 = vpack.c.b16 %v294, %v293
  %v299 = vpack.c.b16 %v296, %v295
  %v304 = vsel %vm233, %v278, 0
  %306 = vmatprep.subr.bf16.mxu0 0
  %307 = vmatpush1.bf16.msra.mxu0 0
  %308 = vmatprep.subr.bf16.mxu0 0
  %309 = vmatpush1.bf16.msra.mxu0 0
  %310 = vmatprep.subr.bf16.mxu0 0
  %311 = vmatpush1.bf16.msra.mxu0 0
  %312 = vmatprep.subr.bf16.mxu0 0
  %313 = vmatpush1.bf16.msra.mxu0 0
  %314 = vmatprep.subr.bf16.mxu0 0
  %315 = vmatpush1.bf16.msra.mxu0 0
  %316 = vmatprep.subr.bf16.mxu0 0
  %317 = vmatpush1.bf16.msra.mxu0 %v299
  %318 = vmatprep.subr.bf16.mxu0 0
  %319 = vmatpush1.bf16.msra.mxu0 %v298
  %320 = vmatprep.subr.bf16.mxu0 0
  %321 = vmatpush1.bf16.msra.mxu0 %v297
  %322 = vmatprep.subr.bf16.mxu0 0
  %323 = vmatpush2.bf16.msra.mxu0 0
  %324 = vmatprep.subr.bf16.mxu0 0
  %325 = vmatpush2.bf16.msra.mxu0 0
  %326 = vmatprep.subr.bf16.mxu0 0
  %327 = vmatpush2.bf16.msra.mxu0 0
  %328 = vmatprep.subr.bf16.mxu0 0
  %329 = vmatpush2.bf16.msra.mxu0 0
  %330 = vmatprep.subr.bf16.mxu0 0
  %331 = vmatpush2.bf16.msra.mxu0 0
  %332 = vmatprep.subr.bf16.mxu0 0
  %333 = vmatpush2.bf16.msra.mxu0 0
  %334 = vmatprep.subr.bf16.mxu0 0
  %335 = vmatpush2.bf16.msra.mxu0 0
  %336 = vmatprep.subr.bf16.mxu0 0
  %337 = vmatpush2.bf16.msra.mxu0 0
  %338 = vmatprep.mubr.bf16.mxu0 0
  %339 = vmatmul.mubr.bf16.gmra.mxu0 %v304
  %v340 = vpop.f32.mrf.mxu0
  %v341 = vadd.f32 0.0, %v340
  %v342 = vpop.f32.mrf.mxu0
  %v343 = vpop.f32.mrf.mxu0
  %v344 = vpop.f32.mrf.mxu0
  %345 = vdwg.mxu0
  %vm346 = vcmask 7168
  %347 = vst.msk [vmem:[%s10] sm:$0xff] %vm346, %v341
  %v348 = vld [vmem:[%s9] sm:$0xf]
  %v349 = vld [vmem:[%s9 + $0x4] sm:$0xf]
  %v350 = vld [vmem:[%s9 + $0x8] sm:$0xf]
  %v351 = vld [vmem:[%s9 + $0xc] sm:$0xf]
  %v352 = vld [vmem:[%s9 + $0x10] sm:$0xf]
  %v353 = vld [vmem:[%s9 + $0x14] sm:$0xf]
  %v360 = vunpack.c.l.b16 %v348
  %v361 = vunpack.c.l.b16 %v349
  %v362 = vunpack.c.l.b16 %v350
  %v363 = vunpack.c.l.b16 %v351
  %v364 = vunpack.c.l.b16 %v352
  %v365 = vunpack.c.l.b16 %v353
  %v366 = vpack.c.b16 %v361, %v360
  %v367 = vpack.c.b16 %v363, %v362
  %v368 = vpack.c.b16 %v365, %v364
  %372 = vmatprep.subr.bf16.mxu0 0
  %373 = vmatpush1.bf16.msra.mxu0 0
  %374 = vmatprep.subr.bf16.mxu0 0
  %375 = vmatpush1.bf16.msra.mxu0 0
  %376 = vmatprep.subr.bf16.mxu0 0
  %377 = vmatpush1.bf16.msra.mxu0 0
  %378 = vmatprep.subr.bf16.mxu0 0
  %379 = vmatpush1.bf16.msra.mxu0 0
  %380 = vmatprep.subr.bf16.mxu0 0
  %381 = vmatpush1.bf16.msra.mxu0 0
  %382 = vmatprep.subr.bf16.mxu0 0
  %383 = vmatpush1.bf16.msra.mxu0 %v368
  %384 = vmatprep.subr.bf16.mxu0 0
  %385 = vmatpush1.bf16.msra.mxu0 %v367
  %386 = vmatprep.subr.bf16.mxu0 0
  %387 = vmatpush1.bf16.msra.mxu0 %v366
  %388 = vmatprep.subr.bf16.mxu0 0
  %389 = vmatpush2.bf16.msra.mxu0 0
  %390 = vmatprep.subr.bf16.mxu0 0
  %391 = vmatpush2.bf16.msra.mxu0 0
  %392 = vmatprep.subr.bf16.mxu0 0
  %393 = vmatpush2.bf16.msra.mxu0 0
  %394 = vmatprep.subr.bf16.mxu0 0
  %395 = vmatpush2.bf16.msra.mxu0 0
  %396 = vmatprep.subr.bf16.mxu0 0
  %397 = vmatpush2.bf16.msra.mxu0 0
  %398 = vmatprep.subr.bf16.mxu0 0
  %399 = vmatpush2.bf16.msra.mxu0 0
  %400 = vmatprep.subr.bf16.mxu0 0
  %401 = vmatpush2.bf16.msra.mxu0 0
  %402 = vmatprep.subr.bf16.mxu0 0
  %403 = vmatpush2.bf16.msra.mxu0 0
  %404 = vmatprep.mubr.bf16.mxu0 0
  %405 = vmatmul.mubr.bf16.gmra.mxu0 %v304
  %v406 = vpop.f32.mrf.mxu0
  %v407 = vadd.f32 0.0, %v406
  %v408 = vpop.f32.mrf.mxu0
  %v409 = vpop.f32.mrf.mxu0
  %v410 = vpop.f32.mrf.mxu0
  %411 = vdwg.mxu0
  %412 = vst.msk [vmem:[%s11] sm:$0xff] %vm346, %v407
  // Predicated region
  $region42: #{tpu_custom_call.1} parent=0 // pred_check
    _
  $region43: #{tpu_custom_call.1} parent=0 // pred_check_branch
    %414 = sbr.rel (0) target = $region45
  $region44: #{tpu_custom_call.1} parent=0 // pred_region
    _
  $region45: #{tpu_custom_call.1} parent=0 // pred_fallthru
    _
  // Predicated region
  $region46: #{tpu_custom_call.1} parent=0 // pred_check
    _
  $region47: #{tpu_custom_call.1} parent=0 // pred_check_branch
    %416 = sbr.rel (0) target = $region49
  $region48: #{tpu_custom_call.1} parent=0 // pred_region
    _
  $region49: #{tpu_custom_call.1} parent=0 // pred_fallthru
    _
  // Predicated region
  $region50: #{tpu_custom_call.1} parent=0 // pred_check
    _
  $region51: #{tpu_custom_call.1} parent=0 // pred_check_branch
    %418 = sbr.rel (0) target = $region53
  $region52: #{tpu_custom_call.1} parent=0 // pred_region
    _
  $region53: #{tpu_custom_call.1} parent=0 // pred_fallthru
    _
  // Predicated region
  $region54: #{tpu_custom_call.1} parent=0 // pred_check
    _
  $region55: #{tpu_custom_call.1} parent=0 // pred_check_branch
    %420 = sbr.rel (0) target = $region57
  $region56: #{tpu_custom_call.1} parent=0 // pred_region
    _
  $region57: #{tpu_custom_call.1} parent=0 // pred_fallthru
    _

</llo_original>
